<compile_context>
chip_gen: v5e
topology: v5e:2x2
jax: 0.10.0
libtpu: 0.0.40
codegen_flags: <defaults>
</compile_context>

<pallas_src>
import functools

import jax
import jax.numpy as jnp
from jax.experimental import pallas as pl
from jax.experimental.pallas import tpu as pltpu


def _custom_scale_kernel(x_ref, o_ref, *, scale, shift, clamp):
    # Compute in f32 (free on the VPU; this kernel is HBM-bound), cast back on
    # store.  Note: for bf16 outputs the final cast may round a hair outside
    # the clamp bounds; acceptable for this module's semantics (f32 tests).
    y = x_ref[...].astype(jnp.float32) * scale + shift
    if clamp is not None:
        y = jnp.clip(y, clamp[0], clamp[1])
    o_ref[...] = y.astype(o_ref.dtype)


def _sublane(itemsize):
    # Sub-32-bit dtypes pack along sublanes.
    return {4: 8, 2: 16, 1: 32}.get(itemsize, 8)


def _vmem_budget():
    """Derive (target_block_bytes, vmem_limit_bytes) from physical VMEM."""
    try:
        physical = int(pltpu.get_tpu_info().vmem_capacity_bytes)
    except Exception:
        physical = 64 << 20  # conservative fallback: v7x per-TC VMEM
    # Scoped limit for this kernel: half of physical VMEM, capped at 48 MiB
    # (v7x: 32 MiB, v5e/v6e: 48 MiB -- both well under physical capacity).
    vmem_limit = min(physical // 2, 48 << 20)
    # in+out, double-buffered => ~4x block bytes resident; keep ~4 MiB headroom.
    block = min((vmem_limit - (4 << 20)) // 4, 6 << 20)
    block = max(block, 1 << 20)
    return int(block), int(vmem_limit)


def _pick_width(n, itemsize):
    """Widest lane-dense width dividing n; prefer sublane-dense row counts."""
    sub = _sublane(itemsize)
    candidates = (2048, 1024, 512, 256, 128)
    divisors = [c for c in candidates if n % c == 0]
    for c in divisors:
        if (n // c) % sub == 0:
            return c  # rows form full (sub, 128) vregs -> unmasked vld/vst
    return divisors[0] if divisors else None


def _run_2d(x2d, kernel, *, target_block_bytes, vmem_limit_bytes):
    rows, w = x2d.shape
    itemsize = x2d.dtype.itemsize
    sub = _sublane(itemsize)
    total_bytes = rows * w * itemsize

    tm = (target_block_bytes // (w * itemsize)) // sub * sub
    tm = max(tm, sub)

    # Medium/large tensors: keep >= 2 grid steps so the DMA pipeline (and,
    # with the "parallel" row axis, v7x's two TensorCores) always have work.
    if total_bytes > (4 << 20) and tm * 2 > rows:
        half_rows = pl.cdiv(rows, 2)
        tm = max(sub, ((half_rows + sub - 1) // sub) * sub)

    if tm >= rows:
        tm = rows  # single full-extent block (always a legal block dim)

    grid = (pl.cdiv(rows, tm),)

    return pl.pallas_call(
        kernel,
        out_shape=jax.ShapeDtypeStruct((rows, w), x2d.dtype),
        grid_spec=pltpu.PrefetchScalarGridSpec(
            num_scalar_prefetch=0,
            grid=grid,
            in_specs=[pl.BlockSpec((tm, w), lambda i: (i, 0))],
            out_specs=pl.BlockSpec((tm, w), lambda i: (i, 0)),
        ),
        compiler_params=pltpu.CompilerParams(
            dimension_semantics=("parallel",),
            vmem_limit_bytes=vmem_limit_bytes,
        ),
    )(x2d)


def custom_scale(x, scale=1.0 / 6400, shift=0.0, clamp=None, *,
                 target_block_bytes=None, vmem_limit_bytes=None):
    """Apply x * scale + shift (and optional clamp) via a Pallas TPU kernel."""
    orig_shape = x.shape
    n = x.size
    kernel = functools.partial(
        _custom_scale_kernel, scale=scale, shift=shift, clamp=clamp
    )

    auto_block, auto_limit = _vmem_budget()
    if target_block_bytes is None:
        target_block_bytes = auto_block
    if vmem_limit_bytes is None:
        vmem_limit_bytes = auto_limit

    w = _pick_width(n, x.dtype.itemsize)
    if w is not None:
        out2d = _run_2d(x.reshape(n // w, w), kernel,
                        target_block_bytes=target_block_bytes,
                        vmem_limit_bytes=vmem_limit_bytes)
        return out2d.reshape(orig_shape)

    # Rare fallback: element count not a multiple of 128.  Run the lane-dense
    # kernel on the leading 128-aligned chunk and finish the <128-element tail
    # with a trivial jnp expression (no whole-tensor pad + slice round trip).
    lanes = 128
    flat = x.reshape(-1)
    m = (n // lanes) * lanes

    def _tail_ref(t):
        t = t.astype(jnp.float32) * scale + shift
        if clamp is not None:
            t = jnp.clip(t, clamp[0], clamp[1])
        return t.astype(x.dtype)

    if m == 0:
        return _tail_ref(flat).reshape(orig_shape)

    main = _run_2d(flat[:m].reshape(m // lanes, lanes), kernel,
                   target_block_bytes=target_block_bytes,
                   vmem_limit_bytes=vmem_limit_bytes).reshape(-1)
    tail = _tail_ref(flat[m:])
    return jnp.concatenate([main, tail]).reshape(orig_shape)


if __name__ == "__main__":
    key = jax.random.PRNGKey(0)
    # Small NCHW input consistent with the PyTorch module.
    x = jax.random.normal(key, (2, 4, 16, 16), dtype=jnp.float32) * 1000.0

    scale = 1.0 / 6400
    shift = 0.5
    clamp = (-0.05, 0.6)

    # Clamp path.
    out = jax.block_until_ready(custom_scale(x, scale=scale, shift=shift, clamp=clamp))
    ref = jnp.clip(x * scale + shift, clamp[0], clamp[1])
    assert out.shape == x.shape and out.dtype == x.dtype
    assert jnp.allclose(out, ref, atol=1e-6, rtol=1e-6)

    # Default (no-clamp) module config.
    out2 = jax.block_until_ready(custom_scale(x))
    ref2 = x * (1.0 / 6400)
    assert jnp.allclose(out2, ref2, atol=1e-6, rtol=1e-6)

    # Fallback path: element count not divisible by 128 (main chunk + tail).
    key2 = jax.random.PRNGKey(1)
    y = jax.random.normal(key2, (3, 5, 9), dtype=jnp.float32) * 100.0
    out3 = jax.block_until_ready(custom_scale(y, scale=scale, shift=shift, clamp=clamp))
    ref3 = jnp.clip(y * scale + shift, clamp[0], clamp[1])
    assert out3.shape == y.shape
    assert jnp.allclose(out3, ref3, atol=1e-6, rtol=1e-6)

    # Tiny (<128 element) pure-tail fallback.
    z = jax.random.normal(jax.random.PRNGKey(2), (3, 5, 7), dtype=jnp.float32)
    out4 = jax.block_until_ready(custom_scale(z, scale=scale, shift=shift, clamp=clamp))
    ref4 = jnp.clip(z * scale + shift, clamp[0], clamp[1])
    assert jnp.allclose(out4, ref4, atol=1e-6, rtol=1e-6)

    print("KERNEL_OK")
</pallas_src>

<mosaic_0001>
module attributes {stable_mosaic.version = 11 : i64} {
  func.func @_custom_scale_kernel(%arg0: i32, %arg1: memref<8x256xf32, #tpu.memory_space<vmem>>, %arg2: memref<8x256xf32, #tpu.memory_space<vmem>>) attributes {dimension_semantics = [#tpu.dimension_semantics<parallel>], iteration_bounds = array<i64: 1>, scalar_prefetch = 0 : i64, scratch_operands = 0 : i64, tpu.core_type = #tpu.core_type<tc>, window_params = [{transform_indices = @transform_0, window_bounds = array<i64: 8, 256>}, {transform_indices = @transform_1, window_bounds = array<i64: 8, 256>}]} {
    %c0 = arith.constant 0 : index
    %c0_0 = arith.constant 0 : index
    %0 = vector.load %arg1[%c0, %c0_0] : memref<8x256xf32, #tpu.memory_space<vmem>>, vector<8x256xf32>
    %cst = arith.constant 1.562500e-04 : f32
    %1 = vector.broadcast %cst : f32 to vector<8x256xf32>
    %2 = arith.mulf %0, %1 : vector<8x256xf32>
    %cst_1 = arith.constant 5.000000e-01 : f32
    %3 = vector.broadcast %cst_1 : f32 to vector<8x256xf32>
    %4 = arith.addf %2, %3 : vector<8x256xf32>
    %cst_2 = arith.constant -5.000000e-02 : f32
    %cst_3 = arith.constant 6.000000e-01 : f32
    %5 = vector.broadcast %cst_2 : f32 to vector<8x256xf32>
    %6 = arith.maximumf %5, %4 : vector<8x256xf32>
    %7 = vector.broadcast %cst_3 : f32 to vector<8x256xf32>
    %8 = arith.minimumf %7, %6 : vector<8x256xf32>
    %c0_4 = arith.constant 0 : index
    %c0_5 = arith.constant 0 : index
    %9 = vector.load %arg2[%c0_4, %c0_5] : memref<8x256xf32, #tpu.memory_space<vmem>>, vector<8x256xf32>
    tpu.vector_store %arg2[%c0_4, %c0_5], %8 {strides = array<i32>} : memref<8x256xf32, #tpu.memory_space<vmem>>, vector<8x256xf32>,
    return
  }
  func.func @transform_0(%arg0: i32) -> (i32, i32) {
    %c0_i32 = arith.constant 0 : i32
    %c0_i32_0 = arith.constant 0 : i32
    return %arg0, %c0_i32 : i32, i32
  }
  func.func @transform_1(%arg0: i32) -> (i32, i32) {
    %c0_i32 = arith.constant 0 : i32
    %c0_i32_0 = arith.constant 0 : i32
    return %arg0, %c0_i32 : i32, i32
  }
}

</mosaic_0001>

<llo_original>
// kernel: tpu_custom_call.1
$region0: #{tpu_custom_call.1}
  #allocation0 [shape = 'u32[]', space=smem, size = 0x4, offset = 0x4, fixed_abs, tag = 'smem constant byte address 0x4 - core index']
  #allocation1 [shape = 'u32[72,128]{1,0:T(1,128)}', space=vmem, size = 0x9000, scoped, tag = 'internal scratch']
  %s0 = inlined_call_operand.hbm [shape: f32[8,256], index: 0, kind: input, shape index: {}]
  %s1 = inlined_call_operand.hbm [shape: f32[8,256], index: 1, kind: output, shape index: {}]
  %s2 = sld [smem:[#allocation0]]
  $region18: #{tpu_custom_call.1} parent=0
    _
  %s4 = ssub.s32 1, %s2
  %s5 = scalar_select 0, %s4, %s2
  $region1: #{tpu_custom_call.1} parent=0
    #allocation2 [shape = 'u8[8192]{0}', space=vmem, size = 0x2000, scoped, tag = 'input window, operand 0, single buffered']
    #allocation3 [shape = 's32[1]{0}', space=sflag, size = 0x4, scoped, tag = 'scoped memory for tpu_custom_call.1']
    #allocation4 [shape = 's32[1]{0}', space=sflag, size = 0x4, scoped, tag = 'scoped memory for tpu_custom_call.1']
    #allocation5 [shape = 'u8[8192]{0}', space=vmem, size = 0x2000, scoped, tag = 'output window, operand 0, single buffered']
    %6 = vsyncpa [#allocation3], 0
    %7 = vsyncpa [#allocation4], 0
    // Predicated region
    $region2: #{tpu_custom_call.1} parent=1 // pred_check
      _
    $region3: #{tpu_custom_call.1} parent=1 // pred_check_branch
      %9 = sbr.rel (0) target = $region5
    $region4: #{tpu_custom_call.1} parent=1 // pred_region
      %11 = vsyncadd [#allocation3], 0
      %s13 = sshll.u32 %s0, 4
      %s14 = int_to_ptr.hbm [resolvable:$true] %s13
      %s15 = sshll.u32 [#allocation2], 4
      %s16 = int_to_ptr.vmem [resolvable:$true] %s15
      %18 = dma.hbm_to_vmem [thread:$0]  %s14, 256, %s16, [#allocation3]
    $region5: #{tpu_custom_call.1} parent=1 // pred_fallthru
      _
    // Predicated region
    $region6: #{tpu_custom_call.1} parent=1 // pred_check
      _
    $region7: #{tpu_custom_call.1} parent=1 // pred_check_branch
      %20 = sbr.rel (0) target = $region9
    $region8: #{tpu_custom_call.1} parent=1 // pred_region
      %22 = dma.done [#allocation3], 256
    $region9: #{tpu_custom_call.1} parent=1 // pred_fallthru
      _
    %v23 = vld [vmem:[#allocation2] sm:$0xff]
    %v24 = vld [vmem:[#allocation2 + $0x8] sm:$0xff]
    %v25 = vmul.f32 %v23, 0.00015625
    %v26 = vmul.f32 %v24, 0.00015625
    %v27 = vadd.f32 %v25, 0.5
    %v28 = vadd.f32 %v26, 0.5
    %v29 = vmax.f32 %v27, -0.05
    %v30 = vmax.f32 %v28, -0.05
    %v31 = vmin.f32 %v29, 0.6
    %v32 = vmin.f32 %v30, 0.6
    %33 = vst [vmem:[#allocation5] sm:$0xff] %v31
    %34 = vst [vmem:[#allocation5 + $0x8] sm:$0xff] %v32
    // Predicated region
    $region10: #{tpu_custom_call.1} parent=1 // pred_check
      _
    $region11: #{tpu_custom_call.1} parent=1 // pred_check_branch
      %36 = sbr.rel (0) target = $region13
    $region12: #{tpu_custom_call.1} parent=1 // pred_region
      %38 = vsyncadd [#allocation4], 0
      %s40 = sshll.u32 [#allocation5], 4
      %s41 = int_to_ptr.vmem [resolvable:$true] %s40
      %s42 = sshll.u32 %s1, 4
      %s43 = int_to_ptr.hbm [resolvable:$true] %s42
      %45 = dma.vmem_to_hbm [thread:$0]  %s41, 256, %s43, [#allocation4]
    $region13: #{tpu_custom_call.1} parent=1 // pred_fallthru
      _
    // Predicated region
    $region14: #{tpu_custom_call.1} parent=1 // pred_check
      _
    $region15: #{tpu_custom_call.1} parent=1 // pred_check_branch
      %47 = sbr.rel (0) target = $region17
    $region16: #{tpu_custom_call.1} parent=1 // pred_region
      %49 = dma.done [#allocation4], 256
    $region17: #{tpu_custom_call.1} parent=1 // pred_fallthru
      _
    %50 = vsyncpa [#allocation3], 1
    %51 = vsyncpa [#allocation4], 1

</llo_original>
